<compile_context>
chip_gen: v5e
topology: v5e:2x2
jax: 0.10.0
libtpu: 0.0.40
codegen_flags: <defaults>
</compile_context>

<pallas_src>
import functools

import jax
import jax.numpy as jnp
from jax.experimental import pallas as pl
from jax.experimental.pallas import tpu as pltpu

_LANE = 512          # trailing (lane) tile width, multiple of 128
_MAX_BLOCK_ROWS = 256  # sublane rows per block (256*512*4B = 512 KiB per buffer)


def _ceil_div(a, b):
    return -(-a // b)


def _round_up(a, b):
    return _ceil_div(a, b) * b


def _gaussian_noise_kernel(mean_ref, std_ref, bits_ref, x_ref, o_ref):
    """One grid step = one (channel, spatial-tile). Tile shape (1, BR, LANE)."""
    c = pl.program_id(0)

    bits = bits_ref[...]                       # (1, BR, LANE) uint32
    half = bits.shape[-1] // 2
    scale = jnp.float32(1.0 / (1 << 24))
    mask = jnp.uint32(0xFFFFFF)

    # Two uniforms in (0, 1), one pair per *pair* of output elements.
    u1 = ((bits[..., :half] & mask).astype(jnp.float32) + 0.5) * scale
    u2 = ((bits[..., half:] & mask).astype(jnp.float32) + 0.5) * scale

    # Box-Muller: use BOTH outputs (cos + sin) to fill the two lane halves.
    r = jnp.sqrt(-2.0 * jnp.log(u1))
    theta = jnp.float32(2.0 * jnp.pi) * u2
    z = jnp.concatenate([r * jnp.cos(theta), r * jnp.sin(theta)], axis=-1)

    mean_c = mean_ref[c]                       # scalar reads from SMEM
    std_c = std_ref[c]
    noise = mean_c + std_c * z                 # broadcast once per tile

    o_ref[...] = (x_ref[...].astype(jnp.float32) + noise).astype(o_ref.dtype)


@functools.partial(jax.jit, static_argnames=("block_rows",))
def _run_pallas(mean_arr, std_arr, bits, x, *, block_rows):
    C, rows, lane = x.shape
    grid = (C, rows // block_rows)

    def make_spec():
        return pl.BlockSpec((1, block_rows, lane),
                            lambda c, s, mean, std: (c, s, 0))

    elems = C * rows * lane
    cost = pl.CostEstimate(
        flops=8 * elems,
        transcendentals=2 * elems,             # log+sqrt+cos+sin per 2 elems
        bytes_accessed=elems * (2 * x.dtype.itemsize + 4),
    )

    return pl.pallas_call(
        _gaussian_noise_kernel,
        out_shape=jax.ShapeDtypeStruct(x.shape, x.dtype),
        grid_spec=pltpu.PrefetchScalarGridSpec(
            num_scalar_prefetch=2,             # mean, std live in SMEM
            grid=grid,
            in_specs=[make_spec(),             # bits
                      make_spec()],            # x
            out_specs=make_spec(),
        ),
        compiler_params=pltpu.CompilerParams(
            dimension_semantics=("parallel", "parallel"),
        ),
        cost_estimate=cost,
    )(mean_arr, std_arr, bits, x)


def gaussian_noise(image, mean, std, seed=0):
    """JAX/Pallas equivalent of GaussianNoise.forward (returns a new array;
    the reference mutates in place, which has no JAX equivalent)."""
    image = jnp.asarray(image)
    orig_shape = image.shape

    if image.ndim > 2:
        C = orig_shape[0]
        mean_arr = jnp.asarray(mean, jnp.float32).reshape(C)
        std_arr = jnp.asarray(std, jnp.float32).reshape(C)
    else:
        C = 1
        mean_arr = jnp.full((1,), mean, jnp.float32)
        std_arr = jnp.full((1,), std, jnp.float32)

    flat = image.reshape(C, -1)
    n = flat.shape[1]

    # Lane-dense tiling: pad the flattened spatial axis to a whole number of
    # (block_rows x _LANE) tiles.
    rows_min = _ceil_div(n, _LANE)
    block_rows = min(_MAX_BLOCK_ROWS, _round_up(rows_min, 8))
    tile_elems = block_rows * _LANE
    n_pad = _round_up(n, tile_elems)
    rows = n_pad // _LANE

    x = jnp.pad(flat, ((0, 0), (0, n_pad - n))).reshape(C, rows, _LANE)

    # Raw uniform bits generated outside the kernel (interpret-mode safe);
    # deterministic given `seed`.
    bits = jax.random.bits(jax.random.PRNGKey(seed), (C, rows, _LANE),
                           dtype=jnp.uint32)

    out = _run_pallas(mean_arr, std_arr, bits, x, block_rows=block_rows)
    out = out.reshape(C, n_pad)[:, :n]
    return out.reshape(orig_shape)


if __name__ == "__main__":
    key = jax.random.PRNGKey(0)
    k1, k2 = jax.random.split(key)

    # 3-D case: (C, H, W) image with per-channel mean / std
    # (the module's `len(image.shape) > 2` branch).
    C, H, W = 4, 16, 16
    image = jax.random.normal(k1, (C, H, W), dtype=jnp.float32)
    mean = [0.0, 0.5, -0.5, 1.0]
    std = [1.0, 0.5, 2.0, 0.1]

    out3d = gaussian_noise(image, mean, std, seed=0)
    out3d = jax.block_until_ready(out3d)
    assert out3d.shape == image.shape and out3d.dtype == image.dtype
    assert bool(jnp.all(jnp.isfinite(out3d)))

    # 2-D case: scalar mean / std (the module's `else` branch).
    image2d = jax.random.normal(k2, (H, W), dtype=jnp.float32)
    out2d = gaussian_noise(image2d, 0.0, 1.0, seed=7)
    out2d = jax.block_until_ready(out2d)
    assert out2d.shape == image2d.shape and out2d.dtype == image2d.dtype
    assert bool(jnp.all(jnp.isfinite(out2d)))

    print("KERNEL_OK")
</pallas_src>

<mosaic_0001>
module attributes {stable_mosaic.version = 11 : i64} {
  func.func @_gaussian_noise_kernel(%arg0: i32, %arg1: i32, %arg2: memref<4xf32, #tpu.memory_space<smem>>, %arg3: memref<4xf32, #tpu.memory_space<smem>>, %arg4: memref<1x8x512xi32, #tpu.memory_space<vmem>>, %arg5: memref<1x8x512xf32, #tpu.memory_space<vmem>>, %arg6: memref<1x8x512xf32, #tpu.memory_space<vmem>>) attributes {dimension_semantics = [#tpu.dimension_semantics<parallel>, #tpu.dimension_semantics<parallel>], iteration_bounds = array<i64: 4, 1>, scalar_prefetch = 2 : i64, scratch_operands = 0 : i64, tpu.core_type = #tpu.core_type<tc>, window_params = [{transform_indices = @transform_0, window_bounds = array<i64: 1, 8, 512>}, {transform_indices = @transform_1, window_bounds = array<i64: 1, 8, 512>}, {transform_indices = @transform_2, window_bounds = array<i64: 1, 8, 512>}]} {
    %c0 = arith.constant 0 : index
    %c0_0 = arith.constant 0 : index
    %c0_1 = arith.constant 0 : index
    %0 = vector.load %arg4[%c0, %c0_0, %c0_1] : memref<1x8x512xi32, #tpu.memory_space<vmem>>, vector<1x8x512xi32>
    %1 = vector.extract_strided_slice %0 {offsets = [0, 0, 0], sizes = [1, 8, 256], strides = [1, 1, 1]} : vector<1x8x512xi32> to vector<1x8x256xi32>
    %c16777215_i32 = arith.constant 16777215 : i32
    %2 = vector.broadcast %c16777215_i32 : i32 to vector<1x8x256xi32>
    %3 = arith.andi %1, %2 : vector<1x8x256xi32>
    %4 = arith.uitofp %3 : vector<1x8x256xi32> to vector<1x8x256xf32>
    %cst = arith.constant 5.000000e-01 : f32
    %5 = vector.broadcast %cst : f32 to vector<1x8x256xf32>
    %6 = arith.addf %4, %5 : vector<1x8x256xf32>
    %cst_2 = arith.constant 5.96046448E-8 : f32
    %7 = vector.broadcast %cst_2 : f32 to vector<1x8x256xf32>
    %8 = arith.mulf %6, %7 : vector<1x8x256xf32>
    %9 = vector.extract_strided_slice %0 {offsets = [0, 0, 256], sizes = [1, 8, 256], strides = [1, 1, 1]} : vector<1x8x512xi32> to vector<1x8x256xi32>
    %c16777215_i32_3 = arith.constant 16777215 : i32
    %10 = vector.broadcast %c16777215_i32_3 : i32 to vector<1x8x256xi32>
    %11 = arith.andi %9, %10 : vector<1x8x256xi32>
    %12 = arith.uitofp %11 : vector<1x8x256xi32> to vector<1x8x256xf32>
    %cst_4 = arith.constant 5.000000e-01 : f32
    %13 = vector.broadcast %cst_4 : f32 to vector<1x8x256xf32>
    %14 = arith.addf %12, %13 : vector<1x8x256xf32>
    %cst_5 = arith.constant 5.96046448E-8 : f32
    %15 = vector.broadcast %cst_5 : f32 to vector<1x8x256xf32>
    %16 = arith.mulf %14, %15 : vector<1x8x256xf32>
    %17 = math.log %8 : vector<1x8x256xf32>
    %cst_6 = arith.constant -2.000000e+00 : f32
    %18 = vector.broadcast %cst_6 : f32 to vector<1x8x256xf32>
    %19 = arith.mulf %18, %17 : vector<1x8x256xf32>
    %20 = math.sqrt %19 : vector<1x8x256xf32>
    %cst_7 = arith.constant 6.28318548 : f32
    %21 = vector.broadcast %cst_7 : f32 to vector<1x8x256xf32>
    %22 = arith.mulf %21, %16 : vector<1x8x256xf32>
    %23 = math.cos %22 : vector<1x8x256xf32>
    %24 = arith.mulf %20, %23 : vector<1x8x256xf32>
    %25 = math.sin %22 : vector<1x8x256xf32>
    %26 = arith.mulf %20, %25 : vector<1x8x256xf32>
    %27 = tpu.concatenate %24, %26 in 2 : vector<1x8x256xf32>, vector<1x8x256xf32> -> vector<1x8x512xf32>
    %28 = arith.index_cast %arg0 : i32 to index
    %29 = memref.load %arg2[%28] : memref<4xf32, #tpu.memory_space<smem>>
    %30 = arith.index_cast %arg0 : i32 to index
    %31 = memref.load %arg3[%30] : memref<4xf32, #tpu.memory_space<smem>>
    %32 = vector.broadcast %31 : f32 to vector<1x8x512xf32>
    %33 = arith.mulf %32, %27 : vector<1x8x512xf32>
    %34 = vector.broadcast %29 : f32 to vector<1x8x512xf32>
    %35 = arith.addf %34, %33 : vector<1x8x512xf32>
    %c0_8 = arith.constant 0 : index
    %c0_9 = arith.constant 0 : index
    %c0_10 = arith.constant 0 : index
    %36 = vector.load %arg5[%c0_8, %c0_9, %c0_10] : memref<1x8x512xf32, #tpu.memory_space<vmem>>, vector<1x8x512xf32>
    %37 = arith.addf %36, %35 : vector<1x8x512xf32>
    %c0_11 = arith.constant 0 : index
    %c0_12 = arith.constant 0 : index
    %c0_13 = arith.constant 0 : index
    %38 = vector.load %arg6[%c0_11, %c0_12, %c0_13] : memref<1x8x512xf32, #tpu.memory_space<vmem>>, vector<1x8x512xf32>
    tpu.vector_store %arg6[%c0_11, %c0_12, %c0_13], %37 {strides = array<i32>} : memref<1x8x512xf32, #tpu.memory_space<vmem>>, vector<1x8x512xf32>,
    return
  }
  func.func @transform_0(%arg0: i32, %arg1: i32, %arg2: memref<4xf32, #tpu.memory_space<smem>>, %arg3: memref<4xf32, #tpu.memory_space<smem>>) -> (i32, i32, i32) {
    %c0_i32 = arith.constant 0 : i32
    %c0_i32_0 = arith.constant 0 : i32
    return %arg0, %arg1, %c0_i32 : i32, i32, i32
  }
  func.func @transform_1(%arg0: i32, %arg1: i32, %arg2: memref<4xf32, #tpu.memory_space<smem>>, %arg3: memref<4xf32, #tpu.memory_space<smem>>) -> (i32, i32, i32) {
    %c0_i32 = arith.constant 0 : i32
    %c0_i32_0 = arith.constant 0 : i32
    return %arg0, %arg1, %c0_i32 : i32, i32, i32
  }
  func.func @transform_2(%arg0: i32, %arg1: i32, %arg2: memref<4xf32, #tpu.memory_space<smem>>, %arg3: memref<4xf32, #tpu.memory_space<smem>>) -> (i32, i32, i32) {
    %c0_i32 = arith.constant 0 : i32
    %c0_i32_0 = arith.constant 0 : i32
    return %arg0, %arg1, %c0_i32 : i32, i32, i32
  }
}

</mosaic_0001>

<llo_original>
// kernel: _run_pallas.1
$region0: #{_run_pallas.1}
  #allocation0 [shape = 'u32[]', space=smem, size = 0x4, offset = 0x4, fixed_abs, tag = 'smem constant byte address 0x4 - core index']
  #allocation1 [shape = 'u32[72,128]{1,0:T(1,128)}', space=vmem, size = 0x9000, scoped, tag = 'internal scratch']
  #allocation2 [shape = 's32[1]{0}', space=sflag, size = 0x4, scoped, tag = 'scoped memory for _run_pallas.1']
  #allocation3 [shape = 'u8[512]{0}', space=smem, size = 0x200, scoped, tag = 'prefetched SMEM operand 0']
  #allocation4 [shape = 'u8[512]{0}', space=smem, size = 0x200, scoped, tag = 'prefetched SMEM operand 1']
  %s0 = inlined_call_operand.hbm [shape: f32[4], index: 0, kind: input, shape index: {}]
  %s1 = inlined_call_operand.hbm [shape: f32[4], index: 1, kind: input, shape index: {}]
  %s2 = inlined_call_operand.hbm [shape: u32[4,8,512], index: 2, kind: input, shape index: {}]
  %s3 = inlined_call_operand.hbm [shape: f32[4,8,512], index: 3, kind: input, shape index: {}]
  %s4 = inlined_call_operand.hbm [shape: f32[4,8,512], index: 4, kind: output, shape index: {}]
  %s5 = sld [smem:[#allocation0]]
  $region49: #{_run_pallas.1} parent=0
    _
  %s7 = ssub.s32 1, %s5
  %s8 = scalar_select 0, %s7, %s5
  %s10 = sshll.u32 %s0, 4
  %s11 = int_to_ptr.hbm [resolvable:$true] %s10
  %13 = dma.hbm_to_smem %s11, 16, [#allocation3], [#allocation2]
  %s15 = sshll.u32 %s1, 4
  %s16 = int_to_ptr.hbm [resolvable:$true] %s15
  %18 = dma.hbm_to_smem %s16, 16, [#allocation4], [#allocation2]
  %20 = dma.done [#allocation2], 32
  %21 = sfence
  $region1: #{_run_pallas.1} parent=0
    #allocation5 [shape = 'u8[32768]{0}', space=vmem, size = 0x8000, scoped, tag = 'input window, operand 2']
    #allocation6 [shape = 's32[2]{0}', space=sflag, size = 0x8, scoped, tag = 'scoped memory for _run_pallas.1']
    #allocation7 [shape = 's32[2]{0}', space=sflag, size = 0x8, scoped, tag = 'scoped memory for _run_pallas.1']
    #allocation8 [shape = 'u8[32768]{0}', space=vmem, size = 0x8000, scoped, tag = 'input window, operand 3']
    #allocation9 [shape = 's32[2]{0}', space=sflag, size = 0x8, scoped, tag = 'scoped memory for _run_pallas.1']
    #allocation10 [shape = 'u8[32768]{0}', space=vmem, size = 0x8000, scoped, tag = 'output window, operand 0']
    %22 = vsyncpa [#allocation6], 0
    %s23 = scalar_lea.sflag [#allocation6], 1
    %24 = vsyncpa %s23, 0
    %25 = vsyncpa [#allocation9], 0
    %s26 = scalar_lea.sflag [#allocation9], 1
    %27 = vsyncpa %s26, 0
    %28 = vsyncpa [#allocation7], 0
    %s29 = scalar_lea.sflag [#allocation7], 1
    %30 = vsyncpa %s29, 0
    loop: start=0, step=1, limit=6
    $region2: #{_run_pallas.1} parent=1 // loop_pre_header
      _
    $region3: #{_run_pallas.1} parent=1 // loop_header
      %s32 = sphi 0, %s36
      %p33 = scmp.ge.s32.totalorder %s32, 6
      %s39 = sphi 0, %s51
      %s40 = sphi 0, %s47
      %s41 = sphi 0, %s39
      %s42 = sphi 0, %s40
      %s43 = sphi 0, %s41
      %s44 = sphi 0, %s42
      %s56 = sphi 0, %s58
      %s59 = sphi 0, %s56
      %s60 = sphi 0, %s59
      %s76 = sphi 0, %s60
      %s84 = sphi 0, %s86
      %s87 = sphi 0, %s84
      %s88 = sphi 0, %s87
      %s104 = sphi 0, %s88
      %s112 = sphi 0, %s114
      %s115 = sphi 0, %s112
      %s116 = sphi 0, %s115
      %s132 = sphi 0, %s116
    $region4: #{_run_pallas.1} parent=1 // loop_header_branch
      %35 = sbr.rel (%p33) target = $region8
    $region5: #{_run_pallas.1} parent=1 // loop_body
      %s37 = ssub.s32 %s32, 1
      %s38 = ssub.s32 %s32, 2
      %s45 = sadd.s32 1, %s40
      %p46 = scmp.ge.s32.totalorder %s45, 1
      %s47 = scalar_select %p46, 0, %s45
      %s48 = sadd.s32 1, %s39
      %s49 = scalar_select %p46, %s48, %s39
      %p50 = scmp.ge.s32.totalorder %s49, 4
      %s51 = scalar_select %p50, 0, %s49
      %s52 = ssub.s32 %s39, %s51
      %s53 = ssub.s32 %s40, %s47
      %s54 = sor.u32 %s52, %s53
      %p55 = scmp.eq.s32.totalorder %s54, 0
      %s57 = sadd.s32 %s56, 1
      %s58 = scalar_select %p55, %s56, %s57
      %p61 = pneg %p55
      %p62 = scmp.eq.s32.totalorder %s32, 3
      %p63 = por %p61, %p62
      %p64 = scmp.ne.s32.totalorder %s56, %s59
      %p65 = scmp.eq.s32.totalorder %s32, 0
      %p66 = por %p64, %p65
      %p67 = scmp.ne.s32.totalorder %s56, %s59
      %p68 = scmp.eq.s32.totalorder %s37, 3
      %p69 = por %p67, %p68
      %p70 = scmp.ne.s32.totalorder %s59, %s60
      %p71 = scmp.eq.s32.totalorder %s37, 0
      %p72 = por %p70, %p71
      %p73 = scmp.ne.s32.totalorder %s59, %s60
      %p74 = scmp.eq.s32.totalorder %s38, 3
      %p75 = por %p73, %p74
      %p77 = scmp.ne.s32.totalorder %s60, %s76
      %p78 = scmp.eq.s32.totalorder %s38, 0
      %p79 = por %p77, %p78
      %s80 = ssub.s32 %s39, %s51
      %s81 = ssub.s32 %s40, %s47
      %s82 = sor.u32 %s80, %s81
      %p83 = scmp.eq.s32.totalorder %s82, 0
      %s85 = sadd.s32 %s84, 1
      %s86 = scalar_select %p83, %s84, %s85
      %p89 = pneg %p83
      %p90 = scmp.eq.s32.totalorder %s32, 3
      %p91 = por %p89, %p90
      %p92 = scmp.ne.s32.totalorder %s84, %s87
      %p93 = scmp.eq.s32.totalorder %s32, 0
      %p94 = por %p92, %p93
      %p95 = scmp.ne.s32.totalorder %s84, %s87
      %p96 = scmp.eq.s32.totalorder %s37, 3
      %p97 = por %p95, %p96
      %p98 = scmp.ne.s32.totalorder %s87, %s88
      %p99 = scmp.eq.s32.totalorder %s37, 0
      %p100 = por %p98, %p99
      %p101 = scmp.ne.s32.totalorder %s87, %s88
      %p102 = scmp.eq.s32.totalorder %s38, 3
      %p103 = por %p101, %p102
      %p105 = scmp.ne.s32.totalorder %s88, %s104
      %p106 = scmp.eq.s32.totalorder %s38, 0
      %p107 = por %p105, %p106
      %s108 = ssub.s32 %s39, %s51
      %s109 = ssub.s32 %s40, %s47
      %s110 = sor.u32 %s108, %s109
      %p111 = scmp.eq.s32.totalorder %s110, 0
      %s113 = sadd.s32 %s112, 1
      %s114 = scalar_select %p111, %s112, %s113
      %p117 = pneg %p111
      %p118 = scmp.eq.s32.totalorder %s32, 3
      %p119 = por %p117, %p118
      %p120 = scmp.ne.s32.totalorder %s112, %s115
      %p121 = scmp.eq.s32.totalorder %s32, 0
      %p122 = por %p120, %p121
      %p123 = scmp.ne.s32.totalorder %s112, %s115
      %p124 = scmp.eq.s32.totalorder %s37, 3
      %p125 = por %p123, %p124
      %p126 = scmp.ne.s32.totalorder %s115, %s116
      %p127 = scmp.eq.s32.totalorder %s37, 0
      %p128 = por %p126, %p127
      %p129 = scmp.ne.s32.totalorder %s115, %s116
      %p130 = scmp.eq.s32.totalorder %s38, 3
      %p131 = por %p129, %p130
      %p133 = scmp.ne.s32.totalorder %s116, %s132
      %p134 = scmp.eq.s32.totalorder %s38, 0
      %p135 = por %p133, %p134
      %p136 = scmp.le.s32.totalorder 1, %s32
      %p137 = scmp.lt.s32.totalorder %s32, 5
      %p138 = pnand %p136, %p137
      %p139 = pneg %p138
      // Predicated region
      $region9: #{_run_pallas.1} parent=5 // pred_check
        _
      $region10: #{_run_pallas.1} parent=5 // pred_check_branch
        %141 = sbr.rel (%p138) target = $region12
      $region11: #{_run_pallas.1} parent=5 // pred_region
        %s142 = ssub.s32 %s32, 1
      $region12: #{_run_pallas.1} parent=5 // pred_fallthru
        _
      %p143 = scmp.lt.s32.totalorder %s32, 4
      // Predicated region
      $region13: #{_run_pallas.1} parent=5 // pred_check
        %p144 = pneg %p143
      $region14: #{_run_pallas.1} parent=5 // pred_check_branch
        %146 = sbr.rel (%p144) target = $region16
      $region15: #{_run_pallas.1} parent=5 // pred_region
        // Predicated region
        $region17: #{_run_pallas.1} parent=15 // pred_check
          %p147 = pneg %p66
        $region18: #{_run_pallas.1} parent=15 // pred_check_branch
          %149 = sbr.rel (%p147) target = $region20
        $region19: #{_run_pallas.1} parent=15 // pred_region
          %s150 = sand.u32 %s56, 1
          %s151 = scalar_lea.sflag [#allocation6], %s150
          %s152 = sand.u32 %s56, 1
          %s153 = smul.addr %s152, 32
          %s154 = scalar_lea.vmem [#allocation5], %s153
          %156 = vsyncadd %s151, 0
          %s157 = smul.addr %s40, 4
          %s158 = smul.addr %s39, 4
          %s159 = sadd.s32 %s157, %s158
          %s160 = smul.addr %s159, 8
          %s161 = scalar_lea.hbm %s2, %s160
          %s163 = sshll.u32 %s161, 4
          %s164 = int_to_ptr.hbm [resolvable:$true] %s163
          %s165 = sshll.u32 %s154, 4
          %s166 = int_to_ptr.vmem [resolvable:$true] %s165
          %168 = dma.hbm_to_vmem [thread:$0]  %s164, 512, %s166, %s151
        $region20: #{_run_pallas.1} parent=15 // pred_fallthru
          _
        // Predicated region
        $region21: #{_run_pallas.1} parent=15 // pred_check
          %p169 = pneg %p94
        $region22: #{_run_pallas.1} parent=15 // pred_check_branch
          %171 = sbr.rel (%p169) target = $region24
        $region23: #{_run_pallas.1} parent=15 // pred_region
          %s172 = sand.u32 %s84, 1
          %s173 = scalar_lea.sflag [#allocation9], %s172
          %s174 = sand.u32 %s84, 1
          %s175 = smul.addr %s174, 32
          %s176 = scalar_lea.vmem [#allocation8], %s175
          %178 = vsyncadd %s173, 0
          %s179 = smul.addr %s40, 4
          %s180 = smul.addr %s39, 4
          %s181 = sadd.s32 %s179, %s180
          %s182 = smul.addr %s181, 8
          %s183 = scalar_lea.hbm %s3, %s182
          %s185 = sshll.u32 %s183, 4
          %s186 = int_to_ptr.hbm [resolvable:$true] %s185
          %s187 = sshll.u32 %s176, 4
          %s188 = int_to_ptr.vmem [resolvable:$true] %s187
          %190 = dma.hbm_to_vmem [thread:$0]  %s186, 512, %s188, %s173
        $region24: #{_run_pallas.1} parent=15 // pred_fallthru
          _
      $region16: #{_run_pallas.1} parent=5 // pred_fallthru
        _
      %p191 = scmp.le.s32.totalorder 1, %s32
      %p192 = scmp.lt.s32.totalorder %s32, 5
      %p193 = pnand %p191, %p192
      %p194 = pneg %p193
      // Predicated region
      $region25: #{_run_pallas.1} parent=5 // pred_check
        _
      $region26: #{_run_pallas.1} parent=5 // pred_check_branch
        %196 = sbr.rel (%p193) target = $region28
      $region27: #{_run_pallas.1} parent=5 // pred_region
        %s197 = ssub.s32 %s32, 1
        %s198 = sand.u32 %s59, 1
        %s199 = scalar_lea.sflag [#allocation6], %s198
        %s200 = sand.u32 %s59, 1
        %s201 = smul.addr %s200, 32
        %s202 = scalar_lea.vmem [#allocation5], %s201
        // Predicated region
        $region29: #{_run_pallas.1} parent=27 // pred_check
          %p203 = pneg %p72
        $region30: #{_run_pallas.1} parent=27 // pred_check_branch
          %205 = sbr.rel (%p203) target = $region32
        $region31: #{_run_pallas.1} parent=27 // pred_region
          %207 = dma.done %s199, 512
        $region32: #{_run_pallas.1} parent=27 // pred_fallthru
          _
        %s208 = sand.u32 %s87, 1
        %s209 = scalar_lea.sflag [#allocation9], %s208
        %s210 = sand.u32 %s87, 1
        %s211 = smul.addr %s210, 32
        %s212 = scalar_lea.vmem [#allocation8], %s211
        // Predicated region
        $region33: #{_run_pallas.1} parent=27 // pred_check
          %p213 = pneg %p100
        $region34: #{_run_pallas.1} parent=27 // pred_check_branch
          %215 = sbr.rel (%p213) target = $region36
        $region35: #{_run_pallas.1} parent=27 // pred_region
          %217 = dma.done %s209, 512
        $region36: #{_run_pallas.1} parent=27 // pred_fallthru
          _
        %s218 = sand.u32 %s59, 1
        %s219 = scalar_lea.sflag [#allocation6], %s218
        %s220 = sand.u32 %s59, 1
        %s221 = smul.addr %s220, 32
        %s222 = scalar_lea.vmem [#allocation5], %s221
        %p223 = pneg %p72
        %p224 = pneg %p69
        %s225 = sand.u32 %s87, 1
        %s226 = scalar_lea.sflag [#allocation9], %s225
        %s227 = sand.u32 %s87, 1
        %s228 = smul.addr %s227, 32
        %s229 = scalar_lea.vmem [#allocation8], %s228
        %p230 = pneg %p100
        %p231 = pneg %p97
        %p232 = pneg %p128
        %p233 = pneg %p125
        %s234 = sand.u32 %s115, 1
        %s235 = scalar_lea.sflag [#allocation7], %s234
        %s236 = sand.u32 %s115, 1
        %s237 = smul.addr %s236, 32
        %s238 = scalar_lea.vmem [#allocation10], %s237
        %v239 = vld [vmem:[%s202] sm:$0xff]
        %v240 = vld [vmem:[%s202 + $0x8] sm:$0xff]
        %v241 = vld [vmem:[%s202 + $0x10] sm:$0xff]
        %v242 = vld [vmem:[%s202 + $0x18] sm:$0xff]
        %v243 = vand.u32 %v239, 16777215
        %v244 = vand.u32 %v240, 16777215
        %v245 = vshrl.u32 %v243, 16
        %v246 = vand.u32 %v243, 65535
        %v247 = vcvt.s32.f32 %v245
        %v248 = vmul.f32 %v247, 65536.0
        %v249 = vcvt.s32.f32 %v246
        %v250 = vadd.f32 %v248, %v249
        %v251 = vshrl.u32 %v244, 16
        %v252 = vand.u32 %v244, 65535
        %v253 = vcvt.s32.f32 %v251
        %v254 = vmul.f32 %v253, 65536.0
        %v255 = vcvt.s32.f32 %v252
        %v256 = vadd.f32 %v254, %v255
        %v257 = vadd.f32 %v250, 0.5
        %v258 = vadd.f32 %v256, 0.5
        %v259 = vmul.f32 %v257, 5.9604645e-08
        %v260 = vmul.f32 %v258, 5.9604645e-08
        %v261 = vand.u32 %v241, 16777215
        %v262 = vand.u32 %v242, 16777215
        %v263 = vshrl.u32 %v261, 16
        %v264 = vand.u32 %v261, 65535
        %v265 = vcvt.s32.f32 %v263
        %v266 = vmul.f32 %v265, 65536.0
        %v267 = vcvt.s32.f32 %v264
        %v268 = vadd.f32 %v266, %v267
        %v269 = vshrl.u32 %v262, 16
        %v270 = vand.u32 %v262, 65535
        %v271 = vcvt.s32.f32 %v269
        %v272 = vmul.f32 %v271, 65536.0
        %v273 = vcvt.s32.f32 %v270
        %v274 = vadd.f32 %v272, %v273
        %v275 = vadd.f32 %v268, 0.5
        %v276 = vadd.f32 %v274, 0.5
        %v277 = vmul.f32 %v275, 5.9604645e-08
        %v278 = vmul.f32 %v276, 5.9604645e-08
        %v279 = vlog2.pop %v259
        %v280 = vmul.f32 %v279, 0.6931472
        %v281 = vlog2.pop %v260
        %v282 = vmul.f32 %v281, 0.6931472
        %v283 = vmul.f32 %v280, -2.0
        %v284 = vmul.f32 %v282, -2.0
        %v285 = vrsqrt.pop %v283
        %v286 = vmul.f32 %v285, %v283
        %v287 = vmul.f32 %v286, %v285
        %v288 = vmul.f32 0.5, %v287
        %v289 = vsub.f32 1.5, %v288
        %v290 = vmul.f32 %v285, %v289
        %v291 = vmul.f32 %v283, %v290
        %vm292 = vcmp.eq.f32.partialorder %v283, inf
        %v293 = vsel %vm292, %v283, %v291
        %vm294 = vcmp.eq.f32.partialorder %v283, 0.0
        %v295 = vand.u32 %v283, 2147483648
        %v296 = vsel %vm294, %v295, %v293
        %v297 = vrsqrt.pop %v284
        %v298 = vmul.f32 %v297, %v284
        %v299 = vmul.f32 %v298, %v297
        %v300 = vmul.f32 0.5, %v299
        %v301 = vsub.f32 1.5, %v300
        %v302 = vmul.f32 %v297, %v301
        %v303 = vmul.f32 %v284, %v302
        %vm304 = vcmp.eq.f32.partialorder %v284, inf
        %v305 = vsel %vm304, %v284, %v303
        %vm306 = vcmp.eq.f32.partialorder %v284, 0.0
        %v307 = vand.u32 %v284, 2147483648
        %v308 = vsel %vm306, %v307, %v305
        %v309 = vmul.f32 %v277, 6.2831855
        %v310 = vmul.f32 %v278, 6.2831855
        %v311 = vand.u32 2147483647, %v309
        %vm312 = vcmp.le.f32.partialorder %v311, 0.7853982
        %vm313 = vcmp.lt.s32.totalorder %v309, 0
        %v314 = vand.u32 %v309, 2139095040
        %v315 = vshrl.u32 %v314, 23
        %v316 = vsub.s32 %v315, 127
        %v317 = vand.u32 2147483647, %v309
        %v318 = vand.u32 %v317, 8388607
        %v319 = vor.u32 %v318, 8388608
        %v320 = vsub.s32 0, %v319
        %v321 = vadd.s32 %v316, 1
        %vm322 = vcmp.gt.s32.totalorder %v321, 0
        %v323 = vsel %vm322, %v321, 0
        %v324 = vshrl.u32 %v323, 5
        %v325 = vand.u32 %v323, 31
        %v326 = vsub.s32 32, %v325
        %v327 = vshrl.u32 683565275, %v326
        %v328 = vshll.u32 683565275, %v325
        %v329 = vshrl.u32 2475754826, %v326
        %v330 = vor.u32 %v328, %v329
        %v331 = vshll.u32 2475754826, %v325
        %v332 = vshrl.u32 2131351028, %v326
        %v333 = vor.u32 %v331, %v332
        %v334 = vshll.u32 2131351028, %v325
        %v335 = vshrl.u32 2102212464, %v326
        %v336 = vor.u32 %v334, %v335
        %v337 = vshll.u32 2102212464, %v325
        %v338 = vshrl.u32 920167782, %v326
        %v339 = vor.u32 %v337, %v338
        %v340 = vshll.u32 920167782, %v325
        %v341 = vshrl.u32 1326507024, %v326
        %v342 = vor.u32 %v340, %v341
        %vm343 = vcmp.lt.s32.totalorder %v324, 1
        %vm344 = vcmp.lt.s32.totalorder %v324, 2
        %vm345 = vcmp.lt.s32.totalorder %v324, 3
        %vm346 = vcmp.lt.s32.totalorder %v324, 4
        %v347 = vsel %vm343, %v327, %v330
        %v348 = vsel %vm346, %v336, 2102212464
        %v349 = vsel %vm345, %v333, %v348
        %v350 = vsel %vm344, %v347, %v349
        %v351 = vsel %vm343, %v330, %v333
        %v352 = vsel %vm346, %v339, 920167782
        %v353 = vsel %vm345, %v336, %v352
        %v354 = vsel %vm344, %v351, %v353
        %v355 = vsel %vm343, %v333, %v336
        %v356 = vsel %vm346, %v342, 1326507024
        %v357 = vsel %vm345, %v339, %v356
        %v358 = vsel %vm344, %v355, %v357
        %v359 = vshll.u32 %v319, 8
        %v360 = vand.u32 %v359, 65535
        %v361 = vshrl.u32 %v359, 16
        %v362 = vand.u32 %v358, 65535
        %v363 = vshrl.u32 %v358, 16
        %v364 = vmul.u32 %v360, %v362
        %v365 = vmul.u32 %v360, %v363
        %v366 = vmul.u32 %v361, %v362
        %v367 = vmul.u32 %v361, %v363
        %v368 = vshll.u32 %v365, 16
        %v369 = vshrl.u32 %v365, 16
        %v370 = vshll.u32 %v366, 16
        %v371 = vshrl.u32 %v366, 16
        %vm372 = vc.u32 %v364, %v368
        %v373 = vsel %vm372, 1, 0
        %v374 = vadd.s32 %v364, %v368
        %v375 = vadd.s32 %v367, %v373
        %vm376 = vc.u32 %v374, %v370
        %v377 = vsel %vm376, 1, 0
        %v378 = vadd.s32 %v374, %v370
        %v379 = vadd.s32 %v375, %v377
        %v380 = vadd.s32 %v379, %v369
        %v381 = vadd.s32 %v380, %v371
        %v382 = vand.u32 %v359, 65535
        %v383 = vshrl.u32 %v359, 16
        %v384 = vand.u32 %v354, 65535
        %v385 = vshrl.u32 %v354, 16
        %v386 = vmul.u32 %v382, %v384
        %v387 = vmul.u32 %v382, %v385
        %v388 = vmul.u32 %v383, %v384
        %v389 = vmul.u32 %v383, %v385
        %v390 = vshll.u32 %v387, 16
        %v391 = vshrl.u32 %v387, 16
        %v392 = vshll.u32 %v388, 16
        %v393 = vshrl.u32 %v388, 16
        %vm394 = vc.u32 %v386, %v390
        %v395 = vsel %vm394, 1, 0
        %v396 = vadd.s32 %v386, %v390
        %v397 = vadd.s32 %v389, %v395
        %vm398 = vc.u32 %v396, %v392
        %v399 = vsel %vm398, 1, 0
        %v400 = vadd.s32 %v396, %v392
        %v401 = vadd.s32 %v397, %v399
        %v402 = vadd.s32 %v401, %v391
        %v403 = vadd.s32 %v402, %v393
        %v404 = vmul.u32 %v359, %v350
        %v405 = vadd.s32 %v381, %v400
        %vm406 = vc.u32 %v381, %v400
        %v407 = vadd.s32 %v403, 1
        %v408 = vsel %vm406, %v407, %v403
        %v409 = vadd.s32 %v404, %v408
        %v410 = vadd.s32 %v409, 536870912
        %v411 = vshrl.u32 %v410, 30
        %v412 = vshll.u32 %v411, 30
        %v413 = vsub.s32 %v409, %v412
        %vm414 = vcmp.lt.s32.totalorder %v413, 0
        %v415 = vsub.s32 0, %v413
        %v416 = vsel %vm414, %v415, %v413
        %v417 = vclz %v416
        %v418 = vsub.s32 %v417, 2
        %vm419 = vcmp.gt.s32.totalorder 0, %v418
        %v420 = vsel %vm419, 0, %v418
        %v421 = vsub.s32 32, %v420
        %v422 = vshll.u32 %v413, %v420
        %v423 = vshrl.u32 %v405, %v421
        %v424 = vor.u32 %v422, %v423
        %v425 = vsub.s32 4294967266, %v420
        %v426 = vadd.s32 %v425, 127
        %v427 = vshll.u32 %v426, 23
        %v428 = vor.u32 4788187, %v427
        %v429 = vand.u32 2147483647, %v428
        %v431 = vcvt.s32.f32 %v424
        %v432 = vmul.f32 %v431, %v429
        %v433 = vxor.u32 %v432, 2147483648
        %v434 = vsel %vm313, %v433, %v432
        %v435 = vsub.s32 4, %v411
        %v436 = vsel %vm313, %v435, %v411
        %v437 = vsel %vm312, %v309, %v434
        %v438 = vsel %vm312, 0, %v436
        %v439 = vmul.f32 %v437, %v437
        %v440 = vmul.f32 %v439, -0.001358992
        %v441 = vadd.f32 %v440, 0.041655596
        %v442 = vmul.f32 %v439, %v441
        %v443 = vadd.f32 %v442, -0.4999988
        %v444 = vmul.f32 %v439, %v443
        %v445 = vadd.f32 1.0, %v444
        %v446 = vmul.f32 %v437, %v437
        %v447 = vmul.f32 %v446, -0.00019511016
        %v448 = vadd.f32 %v447, 0.008332121
        %v449 = vmul.f32 %v446, %v448
        %v450 = vadd.f32 %v449, -0.16666654
        %v451 = vmul.f32 %v446, %v450
        %v452 = vadd.f32 %v451, 1.0
        %v453 = vmul.f32 %v452, %v437
        %vm454 = vweird.f32 %v309
        %v455 = vand.u32 %v438, 3
        %vm456 = vcmp.lt.s32.totalorder %v455, 2
        %vm457 = vcmp.eq.s32.totalorder %v455, 0
        %v458 = vxor.u32 %v453, 2147483648
        %v459 = vsel %vm457, %v445, %v458
        %vm460 = vcmp.eq.s32.totalorder %v455, 2
        %v461 = vxor.u32 %v445, 2147483648
        %v462 = vsel %vm460, %v461, %v453
        %v463 = vsel %vm456, %v459, %v462
        %v464 = vsel %vm454, nan, %v463
        %v465 = vand.u32 2147483647, %v310
        %vm466 = vcmp.le.f32.partialorder %v465, 0.7853982
        %vm467 = vcmp.lt.s32.totalorder %v310, 0
        %v468 = vand.u32 %v310, 2139095040
        %v469 = vshrl.u32 %v468, 23
        %v470 = vsub.s32 %v469, 127
        %v471 = vand.u32 2147483647, %v310
        %v472 = vand.u32 %v471, 8388607
        %v473 = vor.u32 %v472, 8388608
        %v474 = vsub.s32 0, %v473
        %v475 = vadd.s32 %v470, 1
        %vm476 = vcmp.gt.s32.totalorder %v475, 0
        %v477 = vsel %vm476, %v475, 0
        %v478 = vshrl.u32 %v477, 5
        %v479 = vand.u32 %v477, 31
        %v480 = vsub.s32 32, %v479
        %v481 = vshrl.u32 683565275, %v480
        %v482 = vshll.u32 683565275, %v479
        %v483 = vshrl.u32 2475754826, %v480
        %v484 = vor.u32 %v482, %v483
        %v485 = vshll.u32 2475754826, %v479
        %v486 = vshrl.u32 2131351028, %v480
        %v487 = vor.u32 %v485, %v486
        %v488 = vshll.u32 2131351028, %v479
        %v489 = vshrl.u32 2102212464, %v480
        %v490 = vor.u32 %v488, %v489
        %v491 = vshll.u32 2102212464, %v479
        %v492 = vshrl.u32 920167782, %v480
        %v493 = vor.u32 %v491, %v492
        %v494 = vshll.u32 920167782, %v479
        %v495 = vshrl.u32 1326507024, %v480
        %v496 = vor.u32 %v494, %v495
        %vm497 = vcmp.lt.s32.totalorder %v478, 1
        %vm498 = vcmp.lt.s32.totalorder %v478, 2
        %vm499 = vcmp.lt.s32.totalorder %v478, 3
        %vm500 = vcmp.lt.s32.totalorder %v478, 4
        %v501 = vsel %vm497, %v481, %v484
        %v502 = vsel %vm500, %v490, 2102212464
        %v503 = vsel %vm499, %v487, %v502
        %v504 = vsel %vm498, %v501, %v503
        %v505 = vsel %vm497, %v484, %v487
        %v506 = vsel %vm500, %v493, 920167782
        %v507 = vsel %vm499, %v490, %v506
        %v508 = vsel %vm498, %v505, %v507
        %v509 = vsel %vm497, %v487, %v490
        %v510 = vsel %vm500, %v496, 1326507024
        %v511 = vsel %vm499, %v493, %v510
        %v512 = vsel %vm498, %v509, %v511
        %v513 = vshll.u32 %v473, 8
        %v514 = vand.u32 %v513, 65535
        %v515 = vshrl.u32 %v513, 16
        %v516 = vand.u32 %v512, 65535
        %v517 = vshrl.u32 %v512, 16
        %v518 = vmul.u32 %v514, %v516
        %v519 = vmul.u32 %v514, %v517
        %v520 = vmul.u32 %v515, %v516
        %v521 = vmul.u32 %v515, %v517
        %v522 = vshll.u32 %v519, 16
        %v523 = vshrl.u32 %v519, 16
        %v524 = vshll.u32 %v520, 16
        %v525 = vshrl.u32 %v520, 16
        %vm526 = vc.u32 %v518, %v522
        %v527 = vsel %vm526, 1, 0
        %v528 = vadd.s32 %v518, %v522
        %v529 = vadd.s32 %v521, %v527
        %vm530 = vc.u32 %v528, %v524
        %v531 = vsel %vm530, 1, 0
        %v532 = vadd.s32 %v528, %v524
        %v533 = vadd.s32 %v529, %v531
        %v534 = vadd.s32 %v533, %v523
        %v535 = vadd.s32 %v534, %v525
        %v536 = vand.u32 %v513, 65535
        %v537 = vshrl.u32 %v513, 16
        %v538 = vand.u32 %v508, 65535
        %v539 = vshrl.u32 %v508, 16
        %v540 = vmul.u32 %v536, %v538
        %v541 = vmul.u32 %v536, %v539
        %v542 = vmul.u32 %v537, %v538
        %v543 = vmul.u32 %v537, %v539
        %v544 = vshll.u32 %v541, 16
        %v545 = vshrl.u32 %v541, 16
        %v546 = vshll.u32 %v542, 16
        %v547 = vshrl.u32 %v542, 16
        %vm548 = vc.u32 %v540, %v544
        %v549 = vsel %vm548, 1, 0
        %v550 = vadd.s32 %v540, %v544
        %v551 = vadd.s32 %v543, %v549
        %vm552 = vc.u32 %v550, %v546
        %v553 = vsel %vm552, 1, 0
        %v554 = vadd.s32 %v550, %v546
        %v555 = vadd.s32 %v551, %v553
        %v556 = vadd.s32 %v555, %v545
        %v557 = vadd.s32 %v556, %v547
        %v558 = vmul.u32 %v513, %v504
        %v559 = vadd.s32 %v535, %v554
        %vm560 = vc.u32 %v535, %v554
        %v561 = vadd.s32 %v557, 1
        %v562 = vsel %vm560, %v561, %v557
        %v563 = vadd.s32 %v558, %v562
        %v564 = vadd.s32 %v563, 536870912
        %v565 = vshrl.u32 %v564, 30
        %v566 = vshll.u32 %v565, 30
        %v567 = vsub.s32 %v563, %v566
        %vm568 = vcmp.lt.s32.totalorder %v567, 0
        %v569 = vsub.s32 0, %v567
        %v570 = vsel %vm568, %v569, %v567
        %v571 = vclz %v570
        %v572 = vsub.s32 %v571, 2
        %vm573 = vcmp.gt.s32.totalorder 0, %v572
        %v574 = vsel %vm573, 0, %v572
        %v575 = vsub.s32 32, %v574
        %v576 = vshll.u32 %v567, %v574
        %v577 = vshrl.u32 %v559, %v575
        %v578 = vor.u32 %v576, %v577
        %v579 = vsub.s32 4294967266, %v574
        %v580 = vadd.s32 %v579, 127
        %v581 = vshll.u32 %v580, 23
        %v582 = vor.u32 4788187, %v581
        %v583 = vand.u32 2147483647, %v582
        %v585 = vcvt.s32.f32 %v578
        %v586 = vmul.f32 %v585, %v583
        %v587 = vxor.u32 %v586, 2147483648
        %v588 = vsel %vm467, %v587, %v586
        %v589 = vsub.s32 4, %v565
        %v590 = vsel %vm467, %v589, %v565
        %v591 = vsel %vm466, %v310, %v588
        %v592 = vsel %vm466, 0, %v590
        %v593 = vmul.f32 %v591, %v591
        %v594 = vmul.f32 %v593, -0.001358992
        %v595 = vadd.f32 %v594, 0.041655596
        %v596 = vmul.f32 %v593, %v595
        %v597 = vadd.f32 %v596, -0.4999988
        %v598 = vmul.f32 %v593, %v597
        %v599 = vadd.f32 1.0, %v598
        %v600 = vmul.f32 %v591, %v591
        %v601 = vmul.f32 %v600, -0.00019511016
        %v602 = vadd.f32 %v601, 0.008332121
        %v603 = vmul.f32 %v600, %v602
        %v604 = vadd.f32 %v603, -0.16666654
        %v605 = vmul.f32 %v600, %v604
        %v606 = vadd.f32 %v605, 1.0
        %v607 = vmul.f32 %v606, %v591
        %vm608 = vweird.f32 %v310
        %v609 = vand.u32 %v592, 3
        %vm610 = vcmp.lt.s32.totalorder %v609, 2
        %vm611 = vcmp.eq.s32.totalorder %v609, 0
        %v612 = vxor.u32 %v607, 2147483648
        %v613 = vsel %vm611, %v599, %v612
        %vm614 = vcmp.eq.s32.totalorder %v609, 2
        %v615 = vxor.u32 %v599, 2147483648
        %v616 = vsel %vm614, %v615, %v607
        %v617 = vsel %vm610, %v613, %v616
        %v618 = vsel %vm608, nan, %v617
        %v619 = vmul.f32 %v296, %v464
        %v620 = vmul.f32 %v308, %v618
        %v621 = vand.u32 2147483647, %v309
        %vm622 = vcmp.le.f32.partialorder %v621, 0.7853982
        %vm623 = vcmp.lt.s32.totalorder %v309, 0
        %v624 = vand.u32 %v309, 2139095040
        %v625 = vshrl.u32 %v624, 23
        %v626 = vsub.s32 %v625, 127
        %v627 = vand.u32 2147483647, %v309
        %v628 = vand.u32 %v627, 8388607
        %v629 = vor.u32 %v628, 8388608
        %v630 = vsub.s32 0, %v629
        %v631 = vadd.s32 %v626, 1
        %vm632 = vcmp.gt.s32.totalorder %v631, 0
        %v633 = vsel %vm632, %v631, 0
        %v634 = vshrl.u32 %v633, 5
        %v635 = vand.u32 %v633, 31
        %v636 = vsub.s32 32, %v635
        %v637 = vshrl.u32 683565275, %v636
        %v638 = vshll.u32 683565275, %v635
        %v639 = vshrl.u32 2475754826, %v636
        %v640 = vor.u32 %v638, %v639
        %v641 = vshll.u32 2475754826, %v635
        %v642 = vshrl.u32 2131351028, %v636
        %v643 = vor.u32 %v641, %v642
        %v644 = vshll.u32 2131351028, %v635
        %v645 = vshrl.u32 2102212464, %v636
        %v646 = vor.u32 %v644, %v645
        %v647 = vshll.u32 2102212464, %v635
        %v648 = vshrl.u32 920167782, %v636
        %v649 = vor.u32 %v647, %v648
        %v650 = vshll.u32 920167782, %v635
        %v651 = vshrl.u32 1326507024, %v636
        %v652 = vor.u32 %v650, %v651
        %vm653 = vcmp.lt.s32.totalorder %v634, 1
        %vm654 = vcmp.lt.s32.totalorder %v634, 2
        %vm655 = vcmp.lt.s32.totalorder %v634, 3
        %vm656 = vcmp.lt.s32.totalorder %v634, 4
        %v657 = vsel %vm653, %v637, %v640
        %v658 = vsel %vm656, %v646, 2102212464
        %v659 = vsel %vm655, %v643, %v658
        %v660 = vsel %vm654, %v657, %v659
        %v661 = vsel %vm653, %v640, %v643
        %v662 = vsel %vm656, %v649, 920167782
        %v663 = vsel %vm655, %v646, %v662
        %v664 = vsel %vm654, %v661, %v663
        %v665 = vsel %vm653, %v643, %v646
        %v666 = vsel %vm656, %v652, 1326507024
        %v667 = vsel %vm655, %v649, %v666
        %v668 = vsel %vm654, %v665, %v667
        %v669 = vshll.u32 %v629, 8
        %v670 = vand.u32 %v669, 65535
        %v671 = vshrl.u32 %v669, 16
        %v672 = vand.u32 %v668, 65535
        %v673 = vshrl.u32 %v668, 16
        %v674 = vmul.u32 %v670, %v672
        %v675 = vmul.u32 %v670, %v673
        %v676 = vmul.u32 %v671, %v672
        %v677 = vmul.u32 %v671, %v673
        %v678 = vshll.u32 %v675, 16
        %v679 = vshrl.u32 %v675, 16
        %v680 = vshll.u32 %v676, 16
        %v681 = vshrl.u32 %v676, 16
        %vm682 = vc.u32 %v674, %v678
        %v683 = vsel %vm682, 1, 0
        %v684 = vadd.s32 %v674, %v678
        %v685 = vadd.s32 %v677, %v683
        %vm686 = vc.u32 %v684, %v680
        %v687 = vsel %vm686, 1, 0
        %v688 = vadd.s32 %v684, %v680
        %v689 = vadd.s32 %v685, %v687
        %v690 = vadd.s32 %v689, %v679
        %v691 = vadd.s32 %v690, %v681
        %v692 = vand.u32 %v669, 65535
        %v693 = vshrl.u32 %v669, 16
        %v694 = vand.u32 %v664, 65535
        %v695 = vshrl.u32 %v664, 16
        %v696 = vmul.u32 %v692, %v694
        %v697 = vmul.u32 %v692, %v695
        %v698 = vmul.u32 %v693, %v694
        %v699 = vmul.u32 %v693, %v695
        %v700 = vshll.u32 %v697, 16
        %v701 = vshrl.u32 %v697, 16
        %v702 = vshll.u32 %v698, 16
        %v703 = vshrl.u32 %v698, 16
        %vm704 = vc.u32 %v696, %v700
        %v705 = vsel %vm704, 1, 0
        %v706 = vadd.s32 %v696, %v700
        %v707 = vadd.s32 %v699, %v705
        %vm708 = vc.u32 %v706, %v702
        %v709 = vsel %vm708, 1, 0
        %v710 = vadd.s32 %v706, %v702
        %v711 = vadd.s32 %v707, %v709
        %v712 = vadd.s32 %v711, %v701
        %v713 = vadd.s32 %v712, %v703
        %v714 = vmul.u32 %v669, %v660
        %v715 = vadd.s32 %v691, %v710
        %vm716 = vc.u32 %v691, %v710
        %v717 = vadd.s32 %v713, 1
        %v718 = vsel %vm716, %v717, %v713
        %v719 = vadd.s32 %v714, %v718
        %v720 = vadd.s32 %v719, 536870912
        %v721 = vshrl.u32 %v720, 30
        %v722 = vshll.u32 %v721, 30
        %v723 = vsub.s32 %v719, %v722
        %vm724 = vcmp.lt.s32.totalorder %v723, 0
        %v725 = vsub.s32 0, %v723
        %v726 = vsel %vm724, %v725, %v723
        %v727 = vclz %v726
        %v728 = vsub.s32 %v727, 2
        %vm729 = vcmp.gt.s32.totalorder 0, %v728
        %v730 = vsel %vm729, 0, %v728
        %v731 = vsub.s32 32, %v730
        %v732 = vshll.u32 %v723, %v730
        %v733 = vshrl.u32 %v715, %v731
        %v734 = vor.u32 %v732, %v733
        %v735 = vsub.s32 4294967266, %v730
        %v736 = vadd.s32 %v735, 127
        %v737 = vshll.u32 %v736, 23
        %v738 = vor.u32 4788187, %v737
        %v739 = vand.u32 2147483647, %v738
        %v741 = vcvt.s32.f32 %v734
        %v742 = vmul.f32 %v741, %v739
        %v743 = vxor.u32 %v742, 2147483648
        %v744 = vsel %vm623, %v743, %v742
        %v745 = vsub.s32 4, %v721
        %v746 = vsel %vm623, %v745, %v721
        %v747 = vsel %vm622, %v309, %v744
        %v748 = vsel %vm622, 0, %v746
        %v749 = vmul.f32 %v747, %v747
        %v750 = vmul.f32 %v749, -0.001358992
        %v751 = vadd.f32 %v750, 0.041655596
        %v752 = vmul.f32 %v749, %v751
        %v753 = vadd.f32 %v752, -0.4999988
        %v754 = vmul.f32 %v749, %v753
        %v755 = vadd.f32 1.0, %v754
        %v756 = vmul.f32 %v747, %v747
        %v757 = vmul.f32 %v756, -0.00019511016
        %v758 = vadd.f32 %v757, 0.008332121
        %v759 = vmul.f32 %v756, %v758
        %v760 = vadd.f32 %v759, -0.16666654
        %v761 = vmul.f32 %v756, %v760
        %v762 = vadd.f32 %v761, 1.0
        %v763 = vmul.f32 %v762, %v747
        %vm764 = vweird.f32 %v309
        %v765 = vadd.s32 %v748, 3
        %v766 = vand.u32 %v765, 3
        %vm767 = vcmp.lt.s32.totalorder %v766, 2
        %vm768 = vcmp.eq.s32.totalorder %v766, 0
        %v769 = vxor.u32 %v763, 2147483648
        %v770 = vsel %vm768, %v755, %v769
        %vm771 = vcmp.eq.s32.totalorder %v766, 2
        %v772 = vxor.u32 %v755, 2147483648
        %v773 = vsel %vm771, %v772, %v763
        %v774 = vsel %vm767, %v770, %v773
        %v775 = vsel %vm764, nan, %v774
        %v776 = vand.u32 2147483647, %v310
        %vm777 = vcmp.le.f32.partialorder %v776, 0.7853982
        %vm778 = vcmp.lt.s32.totalorder %v310, 0
        %v779 = vand.u32 %v310, 2139095040
        %v780 = vshrl.u32 %v779, 23
        %v781 = vsub.s32 %v780, 127
        %v782 = vand.u32 2147483647, %v310
        %v783 = vand.u32 %v782, 8388607
        %v784 = vor.u32 %v783, 8388608
        %v785 = vsub.s32 0, %v784
        %v786 = vadd.s32 %v781, 1
        %vm787 = vcmp.gt.s32.totalorder %v786, 0
        %v788 = vsel %vm787, %v786, 0
        %v789 = vshrl.u32 %v788, 5
        %v790 = vand.u32 %v788, 31
        %v791 = vsub.s32 32, %v790
        %v792 = vshrl.u32 683565275, %v791
        %v793 = vshll.u32 683565275, %v790
        %v794 = vshrl.u32 2475754826, %v791
        %v795 = vor.u32 %v793, %v794
        %v796 = vshll.u32 2475754826, %v790
        %v797 = vshrl.u32 2131351028, %v791
        %v798 = vor.u32 %v796, %v797
        %v799 = vshll.u32 2131351028, %v790
        %v800 = vshrl.u32 2102212464, %v791
        %v801 = vor.u32 %v799, %v800
        %v802 = vshll.u32 2102212464, %v790
        %v803 = vshrl.u32 920167782, %v791
        %v804 = vor.u32 %v802, %v803
        %v805 = vshll.u32 920167782, %v790
        %v806 = vshrl.u32 1326507024, %v791
        %v807 = vor.u32 %v805, %v806
        %vm808 = vcmp.lt.s32.totalorder %v789, 1
        %vm809 = vcmp.lt.s32.totalorder %v789, 2
        %vm810 = vcmp.lt.s32.totalorder %v789, 3
        %vm811 = vcmp.lt.s32.totalorder %v789, 4
        %v812 = vsel %vm808, %v792, %v795
        %v813 = vsel %vm811, %v801, 2102212464
        %v814 = vsel %vm810, %v798, %v813
        %v815 = vsel %vm809, %v812, %v814
        %v816 = vsel %vm808, %v795, %v798
        %v817 = vsel %vm811, %v804, 920167782
        %v818 = vsel %vm810, %v801, %v817
        %v819 = vsel %vm809, %v816, %v818
        %v820 = vsel %vm808, %v798, %v801
        %v821 = vsel %vm811, %v807, 1326507024
        %v822 = vsel %vm810, %v804, %v821
        %v823 = vsel %vm809, %v820, %v822
        %v824 = vshll.u32 %v784, 8
        %v825 = vand.u32 %v824, 65535
        %v826 = vshrl.u32 %v824, 16
        %v827 = vand.u32 %v823, 65535
        %v828 = vshrl.u32 %v823, 16
        %v829 = vmul.u32 %v825, %v827
        %v830 = vmul.u32 %v825, %v828
        %v831 = vmul.u32 %v826, %v827
        %v832 = vmul.u32 %v826, %v828
        %v833 = vshll.u32 %v830, 16
        %v834 = vshrl.u32 %v830, 16
        %v835 = vshll.u32 %v831, 16
        %v836 = vshrl.u32 %v831, 16
        %vm837 = vc.u32 %v829, %v833
        %v838 = vsel %vm837, 1, 0
        %v839 = vadd.s32 %v829, %v833
        %v840 = vadd.s32 %v832, %v838
        %vm841 = vc.u32 %v839, %v835
        %v842 = vsel %vm841, 1, 0
        %v843 = vadd.s32 %v839, %v835
        %v844 = vadd.s32 %v840, %v842
        %v845 = vadd.s32 %v844, %v834
        %v846 = vadd.s32 %v845, %v836
        %v847 = vand.u32 %v824, 65535
        %v848 = vshrl.u32 %v824, 16
        %v849 = vand.u32 %v819, 65535
        %v850 = vshrl.u32 %v819, 16
        %v851 = vmul.u32 %v847, %v849
        %v852 = vmul.u32 %v847, %v850
        %v853 = vmul.u32 %v848, %v849
        %v854 = vmul.u32 %v848, %v850
        %v855 = vshll.u32 %v852, 16
        %v856 = vshrl.u32 %v852, 16
        %v857 = vshll.u32 %v853, 16
        %v858 = vshrl.u32 %v853, 16
        %vm859 = vc.u32 %v851, %v855
        %v860 = vsel %vm859, 1, 0
        %v861 = vadd.s32 %v851, %v855
        %v862 = vadd.s32 %v854, %v860
        %vm863 = vc.u32 %v861, %v857
        %v864 = vsel %vm863, 1, 0
        %v865 = vadd.s32 %v861, %v857
        %v866 = vadd.s32 %v862, %v864
        %v867 = vadd.s32 %v866, %v856
        %v868 = vadd.s32 %v867, %v858
        %v869 = vmul.u32 %v824, %v815
        %v870 = vadd.s32 %v846, %v865
        %vm871 = vc.u32 %v846, %v865
        %v872 = vadd.s32 %v868, 1
        %v873 = vsel %vm871, %v872, %v868
        %v874 = vadd.s32 %v869, %v873
        %v875 = vadd.s32 %v874, 536870912
        %v876 = vshrl.u32 %v875, 30
        %v877 = vshll.u32 %v876, 30
        %v878 = vsub.s32 %v874, %v877
        %vm879 = vcmp.lt.s32.totalorder %v878, 0
        %v880 = vsub.s32 0, %v878
        %v881 = vsel %vm879, %v880, %v878
        %v882 = vclz %v881
        %v883 = vsub.s32 %v882, 2
        %vm884 = vcmp.gt.s32.totalorder 0, %v883
        %v885 = vsel %vm884, 0, %v883
        %v886 = vsub.s32 32, %v885
        %v887 = vshll.u32 %v878, %v885
        %v888 = vshrl.u32 %v870, %v886
        %v889 = vor.u32 %v887, %v888
        %v890 = vsub.s32 4294967266, %v885
        %v891 = vadd.s32 %v890, 127
        %v892 = vshll.u32 %v891, 23
        %v893 = vor.u32 4788187, %v892
        %v894 = vand.u32 2147483647, %v893
        %v896 = vcvt.s32.f32 %v889
        %v897 = vmul.f32 %v896, %v894
        %v898 = vxor.u32 %v897, 2147483648
        %v899 = vsel %vm778, %v898, %v897
        %v900 = vsub.s32 4, %v876
        %v901 = vsel %vm778, %v900, %v876
        %v902 = vsel %vm777, %v310, %v899
        %v903 = vsel %vm777, 0, %v901
        %v904 = vmul.f32 %v902, %v902
        %v905 = vmul.f32 %v904, -0.001358992
        %v906 = vadd.f32 %v905, 0.041655596
        %v907 = vmul.f32 %v904, %v906
        %v908 = vadd.f32 %v907, -0.4999988
        %v909 = vmul.f32 %v904, %v908
        %v910 = vadd.f32 1.0, %v909
        %v911 = vmul.f32 %v902, %v902
        %v912 = vmul.f32 %v911, -0.00019511016
        %v913 = vadd.f32 %v912, 0.008332121
        %v914 = vmul.f32 %v911, %v913
        %v915 = vadd.f32 %v914, -0.16666654
        %v916 = vmul.f32 %v911, %v915
        %v917 = vadd.f32 %v916, 1.0
        %v918 = vmul.f32 %v917, %v902
        %vm919 = vweird.f32 %v310
        %v920 = vadd.s32 %v903, 3
        %v921 = vand.u32 %v920, 3
        %vm922 = vcmp.lt.s32.totalorder %v921, 2
        %vm923 = vcmp.eq.s32.totalorder %v921, 0
        %v924 = vxor.u32 %v918, 2147483648
        %v925 = vsel %vm923, %v910, %v924
        %vm926 = vcmp.eq.s32.totalorder %v921, 2
        %v927 = vxor.u32 %v910, 2147483648
        %v928 = vsel %vm926, %v927, %v918
        %v929 = vsel %vm922, %v925, %v928
        %v930 = vsel %vm919, nan, %v929
        %v931 = vmul.f32 %v296, %v775
        %v932 = vmul.f32 %v308, %v930
        %s933 = sld [smem:[#allocation3 + %s41]]
        %s934 = sld [smem:[#allocation4 + %s41]]
        %v935 = vstv %s934
        %v936 = vmul.f32 %v935, %v619
        %v937 = vmul.f32 %v935, %v620
        %v938 = vmul.f32 %v935, %v931
        %v939 = vmul.f32 %v935, %v932
        %v940 = vstv %s933
        %v941 = vadd.f32 %v940, %v936
        %v942 = vadd.f32 %v940, %v937
        %v943 = vadd.f32 %v940, %v938
        %v944 = vadd.f32 %v940, %v939
        %v945 = vld [vmem:[%s212] sm:$0xff]
        %v946 = vld [vmem:[%s212 + $0x8] sm:$0xff]
        %v947 = vld [vmem:[%s212 + $0x10] sm:$0xff]
        %v948 = vld [vmem:[%s212 + $0x18] sm:$0xff]
        %v949 = vadd.f32 %v945, %v941
        %v950 = vadd.f32 %v946, %v942
        %v951 = vadd.f32 %v947, %v943
        %v952 = vadd.f32 %v948, %v944
        %953 = vst [vmem:[%s238] sm:$0xff] %v949
        %954 = vst [vmem:[%s238 + $0x8] sm:$0xff] %v950
        %955 = vst [vmem:[%s238 + $0x10] sm:$0xff] %v951
        %956 = vst [vmem:[%s238 + $0x18] sm:$0xff] %v952
        %s957 = sand.u32 %s115, 1
        %s958 = scalar_lea.sflag [#allocation7], %s957
        %s959 = sand.u32 %s115, 1
        %s960 = smul.addr %s959, 32
        %s961 = scalar_lea.vmem [#allocation10], %s960
        // Predicated region
        $region37: #{_run_pallas.1} parent=27 // pred_check
          %p962 = pneg %p125
        $region38: #{_run_pallas.1} parent=27 // pred_check_branch
          %964 = sbr.rel (%p962) target = $region40
        $region39: #{_run_pallas.1} parent=27 // pred_region
          %966 = vsyncadd %s958, 0
          %s967 = smul.addr %s42, 4
          %s968 = smul.addr %s41, 4
          %s969 = sadd.s32 %s967, %s968
          %s970 = smul.addr %s969, 8
          %s971 = scalar_lea.hbm %s4, %s970
          %s973 = sshll.u32 %s961, 4
          %s974 = int_to_ptr.vmem [resolvable:$true] %s973
          %s975 = sshll.u32 %s971, 4
          %s976 = int_to_ptr.hbm [resolvable:$true] %s975
          %978 = dma.vmem_to_hbm [thread:$0]  %s974, 512, %s976, %s958
        $region40: #{_run_pallas.1} parent=27 // pred_fallthru
          _
      $region28: #{_run_pallas.1} parent=5 // pred_fallthru
        _
      %p979 = scmp.le.s32.totalorder 2, %s32
      // Predicated region
      $region41: #{_run_pallas.1} parent=5 // pred_check
        %p980 = pneg %p979
      $region42: #{_run_pallas.1} parent=5 // pred_check_branch
        %982 = sbr.rel (%p980) target = $region44
      $region43: #{_run_pallas.1} parent=5 // pred_region
        %s983 = ssub.s32 %s32, 2
        // Predicated region
        $region45: #{_run_pallas.1} parent=43 // pred_check
          %p984 = pneg %p131
        $region46: #{_run_pallas.1} parent=43 // pred_check_branch
          %986 = sbr.rel (%p984) target = $region48
        $region47: #{_run_pallas.1} parent=43 // pred_region
          %s987 = sand.u32 %s116, 1
          %s988 = scalar_lea.sflag [#allocation7], %s987
          %s989 = sand.u32 %s116, 1
          %s990 = smul.addr %s989, 32
          %s991 = scalar_lea.vmem [#allocation10], %s990
          %993 = dma.done %s988, 512
        $region48: #{_run_pallas.1} parent=43 // pred_fallthru
          _
      $region44: #{_run_pallas.1} parent=5 // pred_fallthru
        _
    $region6: #{_run_pallas.1} parent=1 // loop_footer
      %s36 = sadd.s32 1, %s32
    $region7: #{_run_pallas.1} parent=1 // loop_footer_branch
      %31 = sbr.rel target = $region3
    $region8: #{_run_pallas.1} parent=1 // loop_exit
      _
    %994 = vsyncpa [#allocation6], 1
    %s995 = scalar_lea.sflag [#allocation6], 1
    %996 = vsyncpa %s995, 1
    %997 = vsyncpa [#allocation9], 1
    %s998 = scalar_lea.sflag [#allocation9], 1
    %999 = vsyncpa %s998, 1
    %1000 = vsyncpa [#allocation7], 1
    %s1001 = scalar_lea.sflag [#allocation7], 1
    %1002 = vsyncpa %s1001, 1

</llo_original>
